<compile_context>
chip_gen: v6e
topology: v6e:2x2x1
jax: 0.10.0
libtpu: 0.0.40
codegen_flags: <defaults>
</compile_context>

<pallas_src>
import functools

import jax
import jax.numpy as jnp
from jax import lax
from jax.experimental import pallas as pl
from jax.experimental.pallas import tpu as pltpu


def _round_up(a: int, b: int) -> int:
    return -(-a // b) * b


def _descriptor_decoder_kernel(x_ref, w1_ref, b1_ref, w2_ref, b2_ref, o_ref,
                               *, normalize: bool):
    # x_ref:  (TN, C_in)    f32 tile of point features (streamed from HBM)
    # w1_ref: (C_in, C_mid) bf16, VMEM-resident
    # b1_ref: (1, C_mid)    f32,  VMEM-resident
    # w2_ref: (C_mid, C_out) bf16, VMEM-resident
    # b2_ref: (1, C_out)    f32,  VMEM-resident
    # o_ref:  (TN, C_out)   f32 output tile (true out_channels, no padding)
    x = x_ref[...].astype(jnp.bfloat16)          # in-kernel cast, hidden under DMA
    h = jnp.dot(x, w1_ref[...], preferred_element_type=jnp.float32) + b1_ref[...]
    h = jnp.maximum(h, 0.0)                      # MinkowskiReLU
    y = jnp.dot(h.astype(jnp.bfloat16), w2_ref[...],
                preferred_element_type=jnp.float32) + b2_ref[...]
    if normalize:
        # F.normalize: y / max(||y||, 1e-12)  ==  y * rsqrt(max(||y||^2, 1e-24))
        sq = jnp.sum(y * y, axis=-1, keepdims=True)
        y = y * lax.rsqrt(jnp.maximum(sq, 1e-24))
    o_ref[...] = y.astype(o_ref.dtype)


def descriptor_decoder(x, w1, b1, w2, b2, *, normalize=True, tn=8192):
    """x: (N, C_in) f32 point features. Returns (N, C_out) f32 descriptors."""
    N, C_in = x.shape
    C_mid = w1.shape[1]
    C_out = w2.shape[1]
    assert w1.shape == (C_in, C_mid)
    assert w2.shape == (C_mid, C_out)

    # Row tile: large (amortize per-grid-step overhead), multiple of 8, but
    # capped so the grid keeps roughly >= 8 steps when N is modest (keeps both
    # TensorCores busy on megacore parts).
    tn_eff = max(8, min(tn, _round_up(pl.cdiv(N, 8), 8)))
    grid = (pl.cdiv(N, tn_eff),)  # ragged last block handled by Pallas clipping

    # Weights/biases are tiny: cast once in the wrapper, keep VMEM-resident.
    x_f32 = x.astype(jnp.float32)
    w1_c = w1.astype(jnp.bfloat16)
    w2_c = w2.astype(jnp.bfloat16)
    b1_c = b1.reshape(1, C_mid).astype(jnp.float32)
    b2_c = b2.reshape(1, C_out).astype(jnp.float32)

    out = pl.pallas_call(
        functools.partial(_descriptor_decoder_kernel, normalize=normalize),
        out_shape=jax.ShapeDtypeStruct((N, C_out), jnp.float32),
        grid=grid,
        in_specs=[
            pl.BlockSpec((tn_eff, C_in), lambda i: (i, 0)),   # x tile (streamed)
            pl.BlockSpec((C_in, C_mid), lambda i: (0, 0)),    # W1 (resident)
            pl.BlockSpec((1, C_mid), lambda i: (0, 0)),       # b1 (resident)
            pl.BlockSpec((C_mid, C_out), lambda i: (0, 0)),   # W2 (resident)
            pl.BlockSpec((1, C_out), lambda i: (0, 0)),       # b2 (resident)
        ],
        out_specs=pl.BlockSpec((tn_eff, C_out), lambda i: (i, 0)),
        compiler_params=pltpu.CompilerParams(
            dimension_semantics=("parallel",),
        ),
    )(x_f32, w1_c, b1_c, w2_c, b2_c)

    return out


def _reference(x, w1, b1, w2, b2, normalize=True):
    h = jnp.maximum(x @ w1 + b1.reshape(1, -1), 0.0)
    y = h @ w2 + b2.reshape(1, -1)
    if normalize:
        n = jnp.sqrt(jnp.sum(y * y, axis=-1, keepdims=True))
        y = y / jnp.maximum(n, 1e-12)
    return y


if __name__ == "__main__":
    # Module config: in_channels=64, out_channels=32
    #   -> middle_channels = 32 + (64 - 32) // 2 = 48
    in_channels = 64
    out_channels = 32
    middle_channels = out_channels + (in_channels - out_channels) // 2
    n_points = 1000  # active sparse-tensor coordinates (not a tile multiple,
                     # exercises the ragged last block + multi-step grid)

    key = jax.random.PRNGKey(0)
    k_x, k_w1, k_b1, k_w2, k_b2 = jax.random.split(key, 5)

    x = jax.random.normal(k_x, (n_points, in_channels), dtype=jnp.float32)
    # Deterministic synthetic parameter init (same shapes as nn.Linear weights).
    w1 = jax.random.normal(k_w1, (in_channels, middle_channels), dtype=jnp.float32) * 0.05
    b1 = jax.random.normal(k_b1, (1, middle_channels), dtype=jnp.float32) * 0.05
    w2 = jax.random.normal(k_w2, (middle_channels, out_channels), dtype=jnp.float32) * 0.05
    b2 = jax.random.normal(k_b2, (1, out_channels), dtype=jnp.float32) * 0.05

    out = descriptor_decoder(x, w1, b1, w2, b2, normalize=True)
    out = jax.block_until_ready(out)

    ref = _reference(x, w1, b1, w2, b2, normalize=True)
    assert out.shape == (n_points, out_channels)
    # bf16 MXU inputs (x and intermediate h cast in-kernel) -> looser tolerance
    # than pure f32; L2-normalization hides most of the scale error.
    assert jnp.allclose(out, ref, atol=2e-2, rtol=2e-2), "mismatch vs reference"

    print("KERNEL_OK")
</pallas_src>

<mosaic_0001>
module attributes {stable_mosaic.version = 11 : i64} {
  func.func @_descriptor_decoder_kernel(%arg0: i32, %arg1: memref<128x64xf32, #tpu.memory_space<vmem>>, %arg2: memref<64x48xbf16, #tpu.memory_space<vmem>>, %arg3: memref<1x48xf32, #tpu.memory_space<vmem>>, %arg4: memref<48x32xbf16, #tpu.memory_space<vmem>>, %arg5: memref<1x32xf32, #tpu.memory_space<vmem>>, %arg6: memref<128x32xf32, #tpu.memory_space<vmem>>) attributes {dimension_semantics = [#tpu.dimension_semantics<parallel>], iteration_bounds = array<i64: 8>, scalar_prefetch = 0 : i64, scratch_operands = 0 : i64, tpu.core_type = #tpu.core_type<tc>, window_params = [{transform_indices = @transform_0, window_bounds = array<i64: 128, 64>}, {pipeline_mode = #tpu.pipeline_mode<synchronous>, transform_indices = @transform_1, window_bounds = array<i64: 64, 48>}, {pipeline_mode = #tpu.pipeline_mode<synchronous>, transform_indices = @transform_2, window_bounds = array<i64: 1, 48>}, {pipeline_mode = #tpu.pipeline_mode<synchronous>, transform_indices = @transform_3, window_bounds = array<i64: 48, 32>}, {pipeline_mode = #tpu.pipeline_mode<synchronous>, transform_indices = @transform_4, window_bounds = array<i64: 1, 32>}, {transform_indices = @transform_5, window_bounds = array<i64: 128, 32>}]} {
    %c0 = arith.constant 0 : index
    %c0_0 = arith.constant 0 : index
    %0 = vector.load %arg1[%c0, %c0_0] : memref<128x64xf32, #tpu.memory_space<vmem>>, vector<128x64xf32>
    %1 = arith.truncf %0 : vector<128x64xf32> to vector<128x64xbf16>
    %c0_1 = arith.constant 0 : index
    %c0_2 = arith.constant 0 : index
    %2 = vector.load %arg2[%c0_1, %c0_2] : memref<64x48xbf16, #tpu.memory_space<vmem>>, vector<64x48xbf16>
    %cst = arith.constant dense<0.000000e+00> : vector<128x48xf32>
    %3 = tpu.matmul %1, %2, %cst {dimension_numbers = #tpu.dot_dimension_numbers<[1], [0], [0], [1], [0, 0, 1, 1], [], []>} : vector<128x64xbf16>, vector<64x48xbf16>, vector<128x48xf32> -> vector<128x48xf32>
    %c0_3 = arith.constant 0 : index
    %c0_4 = arith.constant 0 : index
    %4 = vector.load %arg3[%c0_3, %c0_4] : memref<1x48xf32, #tpu.memory_space<vmem>>, vector<1x48xf32>
    %5 = vector.broadcast %4 : vector<1x48xf32> to vector<128x48xf32>
    %6 = arith.addf %3, %5 : vector<128x48xf32>
    %cst_5 = arith.constant 0.000000e+00 : f32
    %7 = vector.broadcast %cst_5 : f32 to vector<128x48xf32>
    %8 = arith.maximumf %6, %7 : vector<128x48xf32>
    %9 = arith.truncf %8 : vector<128x48xf32> to vector<128x48xbf16>
    %c0_6 = arith.constant 0 : index
    %c0_7 = arith.constant 0 : index
    %10 = vector.load %arg4[%c0_6, %c0_7] : memref<48x32xbf16, #tpu.memory_space<vmem>>, vector<48x32xbf16>
    %cst_8 = arith.constant dense<0.000000e+00> : vector<128x32xf32>
    %11 = tpu.matmul %9, %10, %cst_8 {dimension_numbers = #tpu.dot_dimension_numbers<[1], [0], [0], [1], [0, 0, 1, 1], [], []>} : vector<128x48xbf16>, vector<48x32xbf16>, vector<128x32xf32> -> vector<128x32xf32>
    %c0_9 = arith.constant 0 : index
    %c0_10 = arith.constant 0 : index
    %12 = vector.load %arg5[%c0_9, %c0_10] : memref<1x32xf32, #tpu.memory_space<vmem>>, vector<1x32xf32>
    %13 = vector.broadcast %12 : vector<1x32xf32> to vector<128x32xf32>
    %14 = arith.addf %11, %13 : vector<128x32xf32>
    %15 = arith.mulf %14, %14 : vector<128x32xf32>
    %cst_11 = arith.constant dense<0.000000e+00> : vector<128xf32>
    %16 = vector.multi_reduction <add>, %15, %cst_11 [1] : vector<128x32xf32> to vector<128xf32>
    %17 = vector.shape_cast %16 : vector<128xf32> to vector<128x1xf32>
    %cst_12 = arith.constant 1.000000e-24 : f32
    %18 = vector.broadcast %cst_12 : f32 to vector<128x1xf32>
    %19 = arith.maximumf %17, %18 : vector<128x1xf32>
    %20 = math.rsqrt %19 : vector<128x1xf32>
    %21 = vector.broadcast %20 : vector<128x1xf32> to vector<128x32xf32>
    %22 = arith.mulf %14, %21 : vector<128x32xf32>
    %c0_13 = arith.constant 0 : index
    %c0_14 = arith.constant 0 : index
    %23 = vector.load %arg6[%c0_13, %c0_14] : memref<128x32xf32, #tpu.memory_space<vmem>>, vector<128x32xf32>
    tpu.vector_store %arg6[%c0_13, %c0_14], %22 {strides = array<i32>} : memref<128x32xf32, #tpu.memory_space<vmem>>, vector<128x32xf32>,
    return
  }
  func.func @transform_0(%arg0: i32) -> (i32, i32) {
    %c0_i32 = arith.constant 0 : i32
    %c0_i32_0 = arith.constant 0 : i32
    return %arg0, %c0_i32 : i32, i32
  }
  func.func @transform_1(%arg0: i32) -> (i32, i32) {
    %c0_i32 = arith.constant 0 : i32
    %c0_i32_0 = arith.constant 0 : i32
    %c0_i32_1 = arith.constant 0 : i32
    return %c0_i32, %c0_i32_0 : i32, i32
  }
  func.func @transform_2(%arg0: i32) -> (i32, i32) {
    %c0_i32 = arith.constant 0 : i32
    %c0_i32_0 = arith.constant 0 : i32
    %c0_i32_1 = arith.constant 0 : i32
    return %c0_i32, %c0_i32_0 : i32, i32
  }
  func.func @transform_3(%arg0: i32) -> (i32, i32) {
    %c0_i32 = arith.constant 0 : i32
    %c0_i32_0 = arith.constant 0 : i32
    %c0_i32_1 = arith.constant 0 : i32
    return %c0_i32, %c0_i32_0 : i32, i32
  }
  func.func @transform_4(%arg0: i32) -> (i32, i32) {
    %c0_i32 = arith.constant 0 : i32
    %c0_i32_0 = arith.constant 0 : i32
    %c0_i32_1 = arith.constant 0 : i32
    return %c0_i32, %c0_i32_0 : i32, i32
  }
  func.func @transform_5(%arg0: i32) -> (i32, i32) {
    %c0_i32 = arith.constant 0 : i32
    %c0_i32_0 = arith.constant 0 : i32
    return %arg0, %c0_i32 : i32, i32
  }
}

</mosaic_0001>

<llo_original>
// kernel: tpu_custom_call.1
$region0: #{tpu_custom_call.1}
  #allocation0 [shape = 'u32[]', space=smem, size = 0x4, offset = 0x4, fixed_abs, tag = 'smem constant byte address 0x4 - core index']
  #allocation1 [shape = 'u32[144,128]{1,0:T(1,128)}', space=vmem, size = 0x12000, scoped, tag = 'internal scratch']
  %s0 = inlined_call_operand.vmem [shape: f32[1000,64], index: 0, kind: input, shape index: {}]
  %s1 = inlined_call_operand.vmem [shape: bf16[64,48], index: 1, kind: input, shape index: {}]
  %s2 = inlined_call_operand.vmem [shape: f32[1,48], index: 2, kind: input, shape index: {}]
  %s3 = inlined_call_operand.vmem [shape: bf16[48,32], index: 3, kind: input, shape index: {}]
  %s4 = inlined_call_operand.vmem [shape: f32[1,32], index: 4, kind: input, shape index: {}]
  %s5 = inlined_call_operand.vmem [shape: f32[1000,32], index: 5, kind: output, shape index: {}]
  %s6 = sld [smem:[#allocation0]]
  $region101: #{tpu_custom_call.1} parent=0
    _
  %s8 = ssub.s32 1, %s6
  %s9 = scalar_select 0, %s8, %s6
  $region1: #{tpu_custom_call.1} parent=0
    #allocation2 [shape = 'u8[131072]{0}', space=vmem, size = 0x20000, scoped, tag = 'output window, operand 0']
    loop: start=0, step=1, limit=10
    $region2: #{tpu_custom_call.1} parent=1 // loop_pre_header
      _
    $region3: #{tpu_custom_call.1} parent=1 // loop_header
      %s11 = sphi 0, %s15
      %p12 = scmp.ge.s32.totalorder %s11, 10
      %s21 = sphi 0, %s23
      %s24 = sphi 0, %s21
      %s25 = sphi 0, %s24
      %s41 = sphi 0, %s25
      %s45 = sphi 0, %s45
      %s47 = sphi 0, %s45
      %s48 = sphi 0, %s47
      %s62 = sphi 0, %s48
      %s66 = sphi 0, %s66
      %s68 = sphi 0, %s66
      %s69 = sphi 0, %s68
      %s83 = sphi 0, %s69
      %s87 = sphi 0, %s87
      %s89 = sphi 0, %s87
      %s90 = sphi 0, %s89
      %s104 = sphi 0, %s90
      %s108 = sphi 0, %s108
      %s110 = sphi 0, %s108
      %s111 = sphi 0, %s110
      %s125 = sphi 0, %s111
      %s131 = sphi 0, %s133
      %s134 = sphi 0, %s131
      %s135 = sphi 0, %s134
      %s151 = sphi 0, %s135
    $region4: #{tpu_custom_call.1} parent=1 // loop_header_branch
      %14 = sbr.rel (%p12) target = $region8
    $region5: #{tpu_custom_call.1} parent=1 // loop_body
      %s16 = ssub.s32 %s11, 1
      %s17 = ssub.s32 %s11, 2
      %s18 = sadd.s32 %s11, 1
      %s19 = ssub.s32 %s11, %s18
      %p20 = scmp.eq.s32.totalorder %s19, 0
      %s22 = sadd.s32 %s21, 1
      %s23 = scalar_select %p20, %s21, %s22
      %p26 = pneg %p20
      %p27 = scmp.eq.s32.totalorder %s11, 7
      %p28 = por %p26, %p27
      %p29 = scmp.ne.s32.totalorder %s21, %s24
      %p30 = scmp.eq.s32.totalorder %s11, 0
      %p31 = por %p29, %p30
      %p32 = scmp.ne.s32.totalorder %s21, %s24
      %p33 = scmp.eq.s32.totalorder %s16, 7
      %p34 = por %p32, %p33
      %p35 = scmp.ne.s32.totalorder %s24, %s25
      %p36 = scmp.eq.s32.totalorder %s16, 0
      %p37 = por %p35, %p36
      %p38 = scmp.ne.s32.totalorder %s24, %s25
      %p39 = scmp.eq.s32.totalorder %s17, 7
      %p40 = por %p38, %p39
      %p42 = scmp.ne.s32.totalorder %s25, %s41
      %p43 = scmp.eq.s32.totalorder %s17, 0
      %p44 = por %p42, %p43
      %s46 = sadd.s32 %s45, 1
      %p49 = scmp.eq.s32.totalorder %s11, 7
      %p50 = scmp.ne.s32.totalorder %s45, %s47
      %p51 = scmp.eq.s32.totalorder %s11, 0
      %p52 = por %p50, %p51
      %p53 = scmp.ne.s32.totalorder %s45, %s47
      %p54 = scmp.eq.s32.totalorder %s16, 7
      %p55 = por %p53, %p54
      %p56 = scmp.ne.s32.totalorder %s47, %s48
      %p57 = scmp.eq.s32.totalorder %s16, 0
      %p58 = por %p56, %p57
      %p59 = scmp.ne.s32.totalorder %s47, %s48
      %p60 = scmp.eq.s32.totalorder %s17, 7
      %p61 = por %p59, %p60
      %p63 = scmp.ne.s32.totalorder %s48, %s62
      %p64 = scmp.eq.s32.totalorder %s17, 0
      %p65 = por %p63, %p64
      %s67 = sadd.s32 %s66, 1
      %p70 = scmp.eq.s32.totalorder %s11, 7
      %p71 = scmp.ne.s32.totalorder %s66, %s68
      %p72 = scmp.eq.s32.totalorder %s11, 0
      %p73 = por %p71, %p72
      %p74 = scmp.ne.s32.totalorder %s66, %s68
      %p75 = scmp.eq.s32.totalorder %s16, 7
      %p76 = por %p74, %p75
      %p77 = scmp.ne.s32.totalorder %s68, %s69
      %p78 = scmp.eq.s32.totalorder %s16, 0
      %p79 = por %p77, %p78
      %p80 = scmp.ne.s32.totalorder %s68, %s69
      %p81 = scmp.eq.s32.totalorder %s17, 7
      %p82 = por %p80, %p81
      %p84 = scmp.ne.s32.totalorder %s69, %s83
      %p85 = scmp.eq.s32.totalorder %s17, 0
      %p86 = por %p84, %p85
      %s88 = sadd.s32 %s87, 1
      %p91 = scmp.eq.s32.totalorder %s11, 7
      %p92 = scmp.ne.s32.totalorder %s87, %s89
      %p93 = scmp.eq.s32.totalorder %s11, 0
      %p94 = por %p92, %p93
      %p95 = scmp.ne.s32.totalorder %s87, %s89
      %p96 = scmp.eq.s32.totalorder %s16, 7
      %p97 = por %p95, %p96
      %p98 = scmp.ne.s32.totalorder %s89, %s90
      %p99 = scmp.eq.s32.totalorder %s16, 0
      %p100 = por %p98, %p99
      %p101 = scmp.ne.s32.totalorder %s89, %s90
      %p102 = scmp.eq.s32.totalorder %s17, 7
      %p103 = por %p101, %p102
      %p105 = scmp.ne.s32.totalorder %s90, %s104
      %p106 = scmp.eq.s32.totalorder %s17, 0
      %p107 = por %p105, %p106
      %s109 = sadd.s32 %s108, 1
      %p112 = scmp.eq.s32.totalorder %s11, 7
      %p113 = scmp.ne.s32.totalorder %s108, %s110
      %p114 = scmp.eq.s32.totalorder %s11, 0
      %p115 = por %p113, %p114
      %p116 = scmp.ne.s32.totalorder %s108, %s110
      %p117 = scmp.eq.s32.totalorder %s16, 7
      %p118 = por %p116, %p117
      %p119 = scmp.ne.s32.totalorder %s110, %s111
      %p120 = scmp.eq.s32.totalorder %s16, 0
      %p121 = por %p119, %p120
      %p122 = scmp.ne.s32.totalorder %s110, %s111
      %p123 = scmp.eq.s32.totalorder %s17, 7
      %p124 = por %p122, %p123
      %p126 = scmp.ne.s32.totalorder %s111, %s125
      %p127 = scmp.eq.s32.totalorder %s17, 0
      %p128 = por %p126, %p127
      %s129 = ssub.s32 %s11, %s18
      %p130 = scmp.eq.s32.totalorder %s129, 0
      %s132 = sadd.s32 %s131, 1
      %s133 = scalar_select %p130, %s131, %s132
      %p136 = pneg %p130
      %p137 = scmp.eq.s32.totalorder %s11, 7
      %p138 = por %p136, %p137
      %p139 = scmp.ne.s32.totalorder %s131, %s134
      %p140 = scmp.eq.s32.totalorder %s11, 0
      %p141 = por %p139, %p140
      %p142 = scmp.ne.s32.totalorder %s131, %s134
      %p143 = scmp.eq.s32.totalorder %s16, 7
      %p144 = por %p142, %p143
      %p145 = scmp.ne.s32.totalorder %s134, %s135
      %p146 = scmp.eq.s32.totalorder %s16, 0
      %p147 = por %p145, %p146
      %p148 = scmp.ne.s32.totalorder %s134, %s135
      %p149 = scmp.eq.s32.totalorder %s17, 7
      %p150 = por %p148, %p149
      %p152 = scmp.ne.s32.totalorder %s135, %s151
      %p153 = scmp.eq.s32.totalorder %s17, 0
      %p154 = por %p152, %p153
      %p155 = scmp.le.s32.totalorder 1, %s11
      %p156 = scmp.lt.s32.totalorder %s11, 9
      %p157 = pnand %p155, %p156
      %p158 = pneg %p157
      // Predicated region
      $region9: #{tpu_custom_call.1} parent=5 // pred_check
        _
      $region10: #{tpu_custom_call.1} parent=5 // pred_check_branch
        %160 = sbr.rel (%p157) target = $region12
      $region11: #{tpu_custom_call.1} parent=5 // pred_region
        %s161 = ssub.s32 %s11, 1
        // Predicated region
        $region13: #{tpu_custom_call.1} parent=11 // pred_check
          %p162 = pneg %p58
        $region14: #{tpu_custom_call.1} parent=11 // pred_check_branch
          %164 = sbr.rel (%p162) target = $region16
        $region15: #{tpu_custom_call.1} parent=11 // pred_region
          _
        $region16: #{tpu_custom_call.1} parent=11 // pred_fallthru
          _
        // Predicated region
        $region17: #{tpu_custom_call.1} parent=11 // pred_check
          %p165 = pneg %p79
        $region18: #{tpu_custom_call.1} parent=11 // pred_check_branch
          %167 = sbr.rel (%p165) target = $region20
        $region19: #{tpu_custom_call.1} parent=11 // pred_region
          _
        $region20: #{tpu_custom_call.1} parent=11 // pred_fallthru
          _
        // Predicated region
        $region21: #{tpu_custom_call.1} parent=11 // pred_check
          %p168 = pneg %p100
        $region22: #{tpu_custom_call.1} parent=11 // pred_check_branch
          %170 = sbr.rel (%p168) target = $region24
        $region23: #{tpu_custom_call.1} parent=11 // pred_region
          _
        $region24: #{tpu_custom_call.1} parent=11 // pred_fallthru
          _
        // Predicated region
        $region25: #{tpu_custom_call.1} parent=11 // pred_check
          %p171 = pneg %p121
        $region26: #{tpu_custom_call.1} parent=11 // pred_check_branch
          %173 = sbr.rel (%p171) target = $region28
        $region27: #{tpu_custom_call.1} parent=11 // pred_region
          _
        $region28: #{tpu_custom_call.1} parent=11 // pred_fallthru
          _
      $region12: #{tpu_custom_call.1} parent=5 // pred_fallthru
        _
      %p174 = scmp.lt.s32.totalorder %s11, 8
      // Predicated region
      $region29: #{tpu_custom_call.1} parent=5 // pred_check
        %p175 = pneg %p174
      $region30: #{tpu_custom_call.1} parent=5 // pred_check_branch
        %177 = sbr.rel (%p175) target = $region32
      $region31: #{tpu_custom_call.1} parent=5 // pred_region
        // Predicated region
        $region33: #{tpu_custom_call.1} parent=31 // pred_check
          %p178 = pneg %p31
        $region34: #{tpu_custom_call.1} parent=31 // pred_check_branch
          %180 = sbr.rel (%p178) target = $region36
        $region35: #{tpu_custom_call.1} parent=31 // pred_region
          %s181 = smul.u32 16, %s11
          %s182 = ssub.s32 125, %s181
          %p183 = scmp.lt.s32.totalorder %s182, 16
          %s184 = scalar_select %p183, %s182, 16
          %s185 = smul.u32 128, %s184
          %p186 = scmp.lt.s32.totalorder %s181, 124
          %s187 = scalar_select %p186, %s181, 124
          %s188 = smul.addr %s187, 8
          %s189 = scalar_lea.vmem %s0, %s188
          %s190 = smul.u32 16, %s11
          %s191 = ssub.s32 125, %s190
          %p192 = scmp.lt.s32.totalorder %s191, 16
          %s193 = scalar_select %p192, %s191, 16
          %s194 = smul.u32 128, %s193
        $region36: #{tpu_custom_call.1} parent=31 // pred_fallthru
          _
      $region32: #{tpu_custom_call.1} parent=5 // pred_fallthru
        _
      %p195 = scmp.le.s32.totalorder 1, %s11
      %p196 = scmp.lt.s32.totalorder %s11, 9
      %p197 = pnand %p195, %p196
      %p198 = pneg %p197
      // Predicated region
      $region37: #{tpu_custom_call.1} parent=5 // pred_check
        _
      $region38: #{tpu_custom_call.1} parent=5 // pred_check_branch
        %200 = sbr.rel (%p197) target = $region40
      $region39: #{tpu_custom_call.1} parent=5 // pred_region
        %s201 = ssub.s32 %s11, 1
        %s202 = smul.u32 16, %s16
        %s203 = ssub.s32 125, %s202
        %p204 = scmp.lt.s32.totalorder %s203, 16
        %s205 = scalar_select %p204, %s203, 16
        %s206 = smul.u32 128, %s205
        %p207 = scmp.lt.s32.totalorder %s202, 124
        %s208 = scalar_select %p207, %s202, 124
        %s209 = smul.addr %s208, 8
        %s210 = scalar_lea.vmem %s0, %s209
        %p211 = pneg %p37
        %p212 = pneg %p34
        %p213 = pneg %p58
        %p214 = pneg %p55
        %p215 = pneg %p79
        %p216 = pneg %p76
        %p217 = pneg %p100
        %p218 = pneg %p97
        %p219 = pneg %p121
        %p220 = pneg %p118
        %p221 = pneg %p147
        %p222 = pneg %p144
        %s223 = sand.u32 %s134, 1
        %s224 = sand.u32 %s134, 1
        %s225 = smul.addr %s224, 128
        %s226 = scalar_lea.vmem [#allocation2], %s225
        %s227 = smul.u32 16, %s16
        %s228 = ssub.s32 125, %s227
        %p229 = scmp.lt.s32.totalorder %s228, 16
        %s230 = scalar_select %p229, %s228, 16
        %s231 = smul.u32 128, %s230
        %p232 = scmp.lt.s32.totalorder %s227, 124
        %s233 = scalar_select %p232, %s227, 124
        %s234 = smul.addr %s233, 8
        %s235 = scalar_lea.vmem %s0, %s234
        %s236 = smul.u32 16, %s16
        %s237 = ssub.s32 125, %s236
        %p238 = scmp.lt.s32.totalorder %s237, 16
        %s239 = scalar_select %p238, %s237, 16
        %s240 = smul.u32 128, %s239
        %s241 = smul.u32 16, %s16
        %s242 = ssub.s32 125, %s241
        %p243 = scmp.lt.s32.totalorder %s242, 16
        %s244 = scalar_select %p243, %s242, 16
        %s245 = smul.u32 128, %s244
        %v247 = vld [vmem:[%s235] sm:$0xff]
        %v248 = vld [vmem:[%s235 + $0x8] sm:$0xff]
        %v249 = vld [vmem:[%s235 + $0x10] sm:$0xff]
        %v250 = vld [vmem:[%s235 + $0x18] sm:$0xff]
        %v251 = vld [vmem:[%s235 + $0x20] sm:$0xff]
        %v252 = vld [vmem:[%s235 + $0x28] sm:$0xff]
        %v253 = vld [vmem:[%s235 + $0x30] sm:$0xff]
        %v254 = vld [vmem:[%s235 + $0x38] sm:$0xff]
        %v255 = vld [vmem:[%s235 + $0x40] sm:$0xff]
        %v256 = vld [vmem:[%s235 + $0x48] sm:$0xff]
        %v257 = vld [vmem:[%s235 + $0x50] sm:$0xff]
        %v258 = vld [vmem:[%s235 + $0x58] sm:$0xff]
        %v259 = vld [vmem:[%s235 + $0x60] sm:$0xff]
        %v260 = vld [vmem:[%s235 + $0x68] sm:$0xff]
        %v261 = vld [vmem:[%s235 + $0x70] sm:$0xff]
        %v262 = vld [vmem:[%s235 + $0x78] sm:$0xff]
        %v263 = vpack.c.bf16 %v248, %v247
        %v264 = vpack.c.bf16 %v250, %v249
        %v265 = vpack.c.bf16 %v252, %v251
        %v266 = vpack.c.bf16 %v254, %v253
        %v267 = vpack.c.bf16 %v256, %v255
        %v268 = vpack.c.bf16 %v258, %v257
        %v269 = vpack.c.bf16 %v260, %v259
        %v270 = vpack.c.bf16 %v262, %v261
        %v271 = vld [vmem:[%s1] sm:$0xf]
        %v272 = vld [vmem:[%s1 + $0x4] sm:$0xf]
        %v273 = vld [vmem:[%s1 + $0x8] sm:$0xf]
        %v274 = vld [vmem:[%s1 + $0xc] sm:$0xf]
        %v275 = vld [vmem:[%s1 + $0x10] sm:$0xf]
        %v276 = vld [vmem:[%s1 + $0x14] sm:$0xf]
        %v277 = vld [vmem:[%s1 + $0x18] sm:$0xf]
        %v278 = vld [vmem:[%s1 + $0x1c] sm:$0xf]
        %v279 = vld [vmem:[%s2] sm:$0x1]
        %v281 = vlaneseq
        %v282 = vshrl.u32 %v281, 7
        %v283 = vsub.s32 0, %v282
        %v284 = vrot.slane %v279, %v283
        %v294 = vunpack.c.l.b16 %v271
        %v295 = vunpack.c.l.b16 %v272
        %v296 = vunpack.c.l.b16 %v273
        %v297 = vunpack.c.l.b16 %v274
        %v298 = vunpack.c.l.b16 %v275
        %v299 = vunpack.c.l.b16 %v276
        %v300 = vunpack.c.l.b16 %v277
        %v301 = vunpack.c.l.b16 %v278
        %v302 = vpack.c.b16 %v295, %v294
        %v303 = vpack.c.b16 %v297, %v296
        %v304 = vpack.c.b16 %v299, %v298
        %v305 = vpack.c.b16 %v301, %v300
        %vm310 = vcmask 523264
        %v312 = vsel %vm310, %v263, 0
        %v315 = vsel %vm310, %v264, 0
        %v318 = vsel %vm310, %v265, 0
        %v321 = vsel %vm310, %v266, 0
        %v324 = vsel %vm310, %v267, 0
        %v327 = vsel %vm310, %v268, 0
        %v330 = vsel %vm310, %v269, 0
        %v333 = vsel %vm310, %v270, 0
        %335 = vmatprep.subr.bf16.mxu0 0
        %336 = vmatpush1.bf16.msra.mxu0 0
        %337 = vmatprep.subr.bf16.mxu0 0
        %338 = vmatpush1.bf16.msra.mxu0 0
        %339 = vmatprep.subr.bf16.mxu0 0
        %340 = vmatpush1.bf16.msra.mxu0 0
        %341 = vmatprep.subr.bf16.mxu0 0
        %342 = vmatpush1.bf16.msra.mxu0 0
        %343 = vmatprep.subr.bf16.mxu0 0
        %344 = vmatpush1.bf16.msra.mxu0 %v305
        %345 = vmatprep.subr.bf16.mxu0 0
        %346 = vmatpush1.bf16.msra.mxu0 %v304
        %347 = vmatprep.subr.bf16.mxu0 0
        %348 = vmatpush1.bf16.msra.mxu0 %v303
        %349 = vmatprep.subr.bf16.mxu0 0
        %350 = vmatpush1.bf16.msra.mxu0 %v302
        %351 = vmatprep.subr.bf16.mxu0 0
        %352 = vmatpush2.bf16.msra.mxu0 0
        %353 = vmatprep.subr.bf16.mxu0 0
        %354 = vmatpush2.bf16.msra.mxu0 0
        %355 = vmatprep.subr.bf16.mxu0 0
        %356 = vmatpush2.bf16.msra.mxu0 0
        %357 = vmatprep.subr.bf16.mxu0 0
        %358 = vmatpush2.bf16.msra.mxu0 0
        %359 = vmatprep.subr.bf16.mxu0 0
        %360 = vmatpush2.bf16.msra.mxu0 0
        %361 = vmatprep.subr.bf16.mxu0 0
        %362 = vmatpush2.bf16.msra.mxu0 0
        %363 = vmatprep.subr.bf16.mxu0 0
        %364 = vmatpush2.bf16.msra.mxu0 0
        %365 = vmatprep.subr.bf16.mxu0 0
        %366 = vmatpush2.bf16.msra.mxu0 0
        %367 = vmatprep.mubr.bf16.mxu0 0
        %368 = vmatmul.mubr.bf16.gmra.mxu0 %v312
        %v369 = vpop.f32.mrf.mxu0
        %v370 = vadd.f32 %v284, %v369
        %v371 = vpop.f32.mrf.mxu0
        %v372 = vpop.f32.mrf.mxu0
        %v373 = vadd.f32 %v284, %v372
        %v374 = vpop.f32.mrf.mxu0
        %375 = vmatprep.mubr.bf16.mxu0 0
        %376 = vmatmul.mubr.bf16.gmra.mxu0 %v315
        %v377 = vpop.f32.mrf.mxu0
        %v378 = vadd.f32 %v284, %v377
        %v379 = vpop.f32.mrf.mxu0
        %v380 = vpop.f32.mrf.mxu0
        %v381 = vadd.f32 %v284, %v380
        %v382 = vpop.f32.mrf.mxu0
        %383 = vmatprep.mubr.bf16.mxu0 0
        %384 = vmatmul.mubr.bf16.gmra.mxu0 %v318
        %v385 = vpop.f32.mrf.mxu0
        %v386 = vadd.f32 %v284, %v385
        %v387 = vpop.f32.mrf.mxu0
        %v388 = vpop.f32.mrf.mxu0
        %v389 = vadd.f32 %v284, %v388
        %v390 = vpop.f32.mrf.mxu0
        %391 = vmatprep.mubr.bf16.mxu0 0
        %392 = vmatmul.mubr.bf16.gmra.mxu0 %v321
        %v393 = vpop.f32.mrf.mxu0
        %v394 = vadd.f32 %v284, %v393
        %v395 = vpop.f32.mrf.mxu0
        %v396 = vpop.f32.mrf.mxu0
        %v397 = vadd.f32 %v284, %v396
        %v398 = vpop.f32.mrf.mxu0
        %399 = vmatprep.mubr.bf16.mxu0 0
        %400 = vmatmul.mubr.bf16.gmra.mxu0 %v324
        %v401 = vpop.f32.mrf.mxu0
        %v402 = vadd.f32 %v284, %v401
        %v403 = vpop.f32.mrf.mxu0
        %v404 = vpop.f32.mrf.mxu0
        %v405 = vadd.f32 %v284, %v404
        %v406 = vpop.f32.mrf.mxu0
        %407 = vmatprep.mubr.bf16.mxu0 0
        %408 = vmatmul.mubr.bf16.gmra.mxu0 %v327
        %v409 = vpop.f32.mrf.mxu0
        %v410 = vadd.f32 %v284, %v409
        %v411 = vpop.f32.mrf.mxu0
        %v412 = vpop.f32.mrf.mxu0
        %v413 = vadd.f32 %v284, %v412
        %v414 = vpop.f32.mrf.mxu0
        %415 = vmatprep.mubr.bf16.mxu0 0
        %416 = vmatmul.mubr.bf16.gmra.mxu0 %v330
        %v417 = vpop.f32.mrf.mxu0
        %v418 = vadd.f32 %v284, %v417
        %v419 = vpop.f32.mrf.mxu0
        %v420 = vpop.f32.mrf.mxu0
        %v421 = vadd.f32 %v284, %v420
        %v422 = vpop.f32.mrf.mxu0
        %423 = vmatprep.mubr.bf16.mxu0 0
        %424 = vmatmul.mubr.bf16.gmra.mxu0 %v333
        %v425 = vpop.f32.mrf.mxu0
        %v426 = vadd.f32 %v284, %v425
        %v427 = vpop.f32.mrf.mxu0
        %v428 = vpop.f32.mrf.mxu0
        %v429 = vadd.f32 %v284, %v428
        %v430 = vpop.f32.mrf.mxu0
        %431 = vdwg.mxu0
        %v432 = vmax.f32 %v370, 0.0
        %v433 = vmax.f32 %v373, 0.0
        %v434 = vmax.f32 %v378, 0.0
        %v435 = vmax.f32 %v381, 0.0
        %v436 = vmax.f32 %v386, 0.0
        %v437 = vmax.f32 %v389, 0.0
        %v438 = vmax.f32 %v394, 0.0
        %v439 = vmax.f32 %v397, 0.0
        %v440 = vmax.f32 %v402, 0.0
        %v441 = vmax.f32 %v405, 0.0
        %v442 = vmax.f32 %v410, 0.0
        %v443 = vmax.f32 %v413, 0.0
        %v444 = vmax.f32 %v418, 0.0
        %v445 = vmax.f32 %v421, 0.0
        %v446 = vmax.f32 %v426, 0.0
        %v447 = vmax.f32 %v429, 0.0
        %v448 = vpack.c.bf16 %v433, %v432
        %v449 = vpack.c.bf16 %v435, %v434
        %v450 = vpack.c.bf16 %v437, %v436
        %v451 = vpack.c.bf16 %v439, %v438
        %v452 = vpack.c.bf16 %v441, %v440
        %v453 = vpack.c.bf16 %v443, %v442
        %v454 = vpack.c.bf16 %v445, %v444
        %v455 = vpack.c.bf16 %v447, %v446
        %v456 = vld [vmem:[%s3] sm:$0xf]
        %v457 = vld [vmem:[%s3 + $0x4] sm:$0xf]
        %v458 = vld [vmem:[%s3 + $0x8] sm:$0xf]
        %v459 = vld [vmem:[%s3 + $0xc] sm:$0xf]
        %v460 = vld [vmem:[%s3 + $0x10] sm:$0xf]
        %v461 = vld [vmem:[%s3 + $0x14] sm:$0xf]
        %v462 = vld [vmem:[%s4] sm:$0x1]
        %v464 = vlaneseq
        %v465 = vshrl.u32 %v464, 7
        %v466 = vsub.s32 0, %v465
        %v467 = vrot.slane %v462, %v466
        %v475 = vunpack.c.l.b16 %v456
        %v476 = vunpack.c.l.b16 %v457
        %v477 = vunpack.c.l.b16 %v458
        %v478 = vunpack.c.l.b16 %v459
        %v479 = vunpack.c.l.b16 %v460
        %v480 = vunpack.c.l.b16 %v461
        %v481 = vpack.c.b16 %v476, %v475
        %v482 = vpack.c.b16 %v478, %v477
        %v483 = vpack.c.b16 %v480, %v479
        %vm487 = vcmask 392192
        %v489 = vsel %vm487, %v448, 0
        %v492 = vsel %vm487, %v449, 0
        %v495 = vsel %vm487, %v450, 0
        %v498 = vsel %vm487, %v451, 0
        %v501 = vsel %vm487, %v452, 0
        %v504 = vsel %vm487, %v453, 0
        %v507 = vsel %vm487, %v454, 0
        %v510 = vsel %vm487, %v455, 0
        %512 = vmatprep.subr.bf16.mxu0 0
        %513 = vmatpush1.bf16.msra.mxu0 0
        %514 = vmatprep.subr.bf16.mxu0 0
        %515 = vmatpush1.bf16.msra.mxu0 0
        %516 = vmatprep.subr.bf16.mxu0 0
        %517 = vmatpush1.bf16.msra.mxu0 0
        %518 = vmatprep.subr.bf16.mxu0 0
        %519 = vmatpush1.bf16.msra.mxu0 0
        %520 = vmatprep.subr.bf16.mxu0 0
        %521 = vmatpush1.bf16.msra.mxu0 0
        %522 = vmatprep.subr.bf16.mxu0 0
        %523 = vmatpush1.bf16.msra.mxu0 %v483
        %524 = vmatprep.subr.bf16.mxu0 0
        %525 = vmatpush1.bf16.msra.mxu0 %v482
        %526 = vmatprep.subr.bf16.mxu0 0
        %527 = vmatpush1.bf16.msra.mxu0 %v481
        %528 = vmatprep.subr.bf16.mxu0 0
        %529 = vmatpush2.bf16.msra.mxu0 0
        %530 = vmatprep.subr.bf16.mxu0 0
        %531 = vmatpush2.bf16.msra.mxu0 0
        %532 = vmatprep.subr.bf16.mxu0 0
        %533 = vmatpush2.bf16.msra.mxu0 0
        %534 = vmatprep.subr.bf16.mxu0 0
        %535 = vmatpush2.bf16.msra.mxu0 0
        %536 = vmatprep.subr.bf16.mxu0 0
        %537 = vmatpush2.bf16.msra.mxu0 0
        %538 = vmatprep.subr.bf16.mxu0 0
        %539 = vmatpush2.bf16.msra.mxu0 0
        %540 = vmatprep.subr.bf16.mxu0 0
        %541 = vmatpush2.bf16.msra.mxu0 0
        %542 = vmatprep.subr.bf16.mxu0 0
        %543 = vmatpush2.bf16.msra.mxu0 0
        %544 = vmatprep.mubr.bf16.mxu0 0
        %545 = vmatmul.mubr.bf16.gmra.mxu0 %v489
        %v546 = vpop.f32.mrf.mxu0
        %v547 = vadd.f32 %v467, %v546
        %v548 = vpop.f32.mrf.mxu0
        %v549 = vpop.f32.mrf.mxu0
        %v550 = vadd.f32 %v467, %v549
        %v551 = vpop.f32.mrf.mxu0
        %552 = vmatprep.mubr.bf16.mxu0 0
        %553 = vmatmul.mubr.bf16.gmra.mxu0 %v492
        %v554 = vpop.f32.mrf.mxu0
        %v555 = vadd.f32 %v467, %v554
        %v556 = vpop.f32.mrf.mxu0
        %v557 = vpop.f32.mrf.mxu0
        %v558 = vadd.f32 %v467, %v557
        %v559 = vpop.f32.mrf.mxu0
        %560 = vmatprep.mubr.bf16.mxu0 0
        %561 = vmatmul.mubr.bf16.gmra.mxu0 %v495
        %v562 = vpop.f32.mrf.mxu0
        %v563 = vadd.f32 %v467, %v562
        %v564 = vpop.f32.mrf.mxu0
        %v565 = vpop.f32.mrf.mxu0
        %v566 = vadd.f32 %v467, %v565
        %v567 = vpop.f32.mrf.mxu0
        %568 = vmatprep.mubr.bf16.mxu0 0
        %569 = vmatmul.mubr.bf16.gmra.mxu0 %v498
        %v570 = vpop.f32.mrf.mxu0
        %v571 = vadd.f32 %v467, %v570
        %v572 = vpop.f32.mrf.mxu0
        %v573 = vpop.f32.mrf.mxu0
        %v574 = vadd.f32 %v467, %v573
        %v575 = vpop.f32.mrf.mxu0
        %576 = vmatprep.mubr.bf16.mxu0 0
        %577 = vmatmul.mubr.bf16.gmra.mxu0 %v501
        %v578 = vpop.f32.mrf.mxu0
        %v579 = vadd.f32 %v467, %v578
        %v580 = vpop.f32.mrf.mxu0
        %v581 = vpop.f32.mrf.mxu0
        %v582 = vadd.f32 %v467, %v581
        %v583 = vpop.f32.mrf.mxu0
        %584 = vmatprep.mubr.bf16.mxu0 0
        %585 = vmatmul.mubr.bf16.gmra.mxu0 %v504
        %v586 = vpop.f32.mrf.mxu0
        %v587 = vadd.f32 %v467, %v586
        %v588 = vpop.f32.mrf.mxu0
        %v589 = vpop.f32.mrf.mxu0
        %v590 = vadd.f32 %v467, %v589
        %v591 = vpop.f32.mrf.mxu0
        %592 = vmatprep.mubr.bf16.mxu0 0
        %593 = vmatmul.mubr.bf16.gmra.mxu0 %v507
        %v594 = vpop.f32.mrf.mxu0
        %v595 = vadd.f32 %v467, %v594
        %v596 = vpop.f32.mrf.mxu0
        %v597 = vpop.f32.mrf.mxu0
        %v598 = vadd.f32 %v467, %v597
        %v599 = vpop.f32.mrf.mxu0
        %600 = vmatprep.mubr.bf16.mxu0 0
        %601 = vmatmul.mubr.bf16.gmra.mxu0 %v510
        %v602 = vpop.f32.mrf.mxu0
        %v603 = vadd.f32 %v467, %v602
        %v604 = vpop.f32.mrf.mxu0
        %v605 = vpop.f32.mrf.mxu0
        %v606 = vadd.f32 %v467, %v605
        %v607 = vpop.f32.mrf.mxu0
        %608 = vdwg.mxu0
        %v609 = vmul.f32 %v547, %v547
        %v610 = vmul.f32 %v550, %v550
        %v611 = vmul.f32 %v555, %v555
        %v612 = vmul.f32 %v558, %v558
        %v613 = vmul.f32 %v563, %v563
        %v614 = vmul.f32 %v566, %v566
        %v615 = vmul.f32 %v571, %v571
        %v616 = vmul.f32 %v574, %v574
        %v617 = vmul.f32 %v579, %v579
        %v618 = vmul.f32 %v582, %v582
        %v619 = vmul.f32 %v587, %v587
        %v620 = vmul.f32 %v590, %v590
        %v621 = vmul.f32 %v595, %v595
        %v622 = vmul.f32 %v598, %v598
        %v623 = vmul.f32 %v603, %v603
        %v624 = vmul.f32 %v606, %v606
        %vm625 = vcmask 261120
        %v626 = vsel %vm625, %v609, 0.0
        %627 = vadd.xlane.f32.xlu0 %v626
        %v628 = vpop.xlane.xlu0 %627
        %v629 = vsel %vm625, %v610, 0.0
        %630 = vadd.xlane.f32.xlu0 %v629
        %v631 = vpop.xlane.xlu0 %630
        %v632 = vsel %vm625, %v611, 0.0
        %633 = vadd.xlane.f32.xlu0 %v632
        %v634 = vpop.xlane.xlu0 %633
        %v635 = vsel %vm625, %v612, 0.0
        %636 = vadd.xlane.f32.xlu0 %v635
        %v637 = vpop.xlane.xlu0 %636
        %v638 = vsel %vm625, %v613, 0.0
        %639 = vadd.xlane.f32.xlu0 %v638
        %v640 = vpop.xlane.xlu0 %639
        %v641 = vsel %vm625, %v614, 0.0
        %642 = vadd.xlane.f32.xlu0 %v641
        %v643 = vpop.xlane.xlu0 %642
        %v644 = vsel %vm625, %v615, 0.0
        %645 = vadd.xlane.f32.xlu0 %v644
        %v646 = vpop.xlane.xlu0 %645
        %v647 = vsel %vm625, %v616, 0.0
        %648 = vadd.xlane.f32.xlu0 %v647
        %v649 = vpop.xlane.xlu0 %648
        %v650 = vsel %vm625, %v617, 0.0
        %651 = vadd.xlane.f32.xlu0 %v650
        %v652 = vpop.xlane.xlu0 %651
        %v653 = vsel %vm625, %v618, 0.0
        %654 = vadd.xlane.f32.xlu0 %v653
        %v655 = vpop.xlane.xlu0 %654
        %v656 = vsel %vm625, %v619, 0.0
        %657 = vadd.xlane.f32.xlu0 %v656
        %v658 = vpop.xlane.xlu0 %657
        %v659 = vsel %vm625, %v620, 0.0
        %660 = vadd.xlane.f32.xlu0 %v659
        %v661 = vpop.xlane.xlu0 %660
        %v662 = vsel %vm625, %v621, 0.0
        %663 = vadd.xlane.f32.xlu0 %v662
        %v664 = vpop.xlane.xlu0 %663
        %v665 = vsel %vm625, %v622, 0.0
        %666 = vadd.xlane.f32.xlu0 %v665
        %v667 = vpop.xlane.xlu0 %666
        %v668 = vsel %vm625, %v623, 0.0
        %669 = vadd.xlane.f32.xlu0 %v668
        %v670 = vpop.xlane.xlu0 %669
        %v671 = vsel %vm625, %v624, 0.0
        %672 = vadd.xlane.f32.xlu0 %v671
        %v673 = vpop.xlane.xlu0 %672
        %v674 = vmax.f32 %v628, 1e-24
        %v675 = vmax.f32 %v631, 1e-24
        %v676 = vmax.f32 %v634, 1e-24
        %v677 = vmax.f32 %v637, 1e-24
        %v678 = vmax.f32 %v640, 1e-24
        %v679 = vmax.f32 %v643, 1e-24
        %v680 = vmax.f32 %v646, 1e-24
        %v681 = vmax.f32 %v649, 1e-24
        %v682 = vmax.f32 %v652, 1e-24
        %v683 = vmax.f32 %v655, 1e-24
        %v684 = vmax.f32 %v658, 1e-24
        %v685 = vmax.f32 %v661, 1e-24
        %v686 = vmax.f32 %v664, 1e-24
        %v687 = vmax.f32 %v667, 1e-24
        %v688 = vmax.f32 %v670, 1e-24
        %v689 = vmax.f32 %v673, 1e-24
        %v690 = vrsqrt.pop %v674
        %v691 = vrsqrt.pop %v675
        %v692 = vrsqrt.pop %v676
        %v693 = vrsqrt.pop %v677
        %v694 = vrsqrt.pop %v678
        %v695 = vrsqrt.pop %v679
        %v696 = vrsqrt.pop %v680
        %v697 = vrsqrt.pop %v681
        %v698 = vrsqrt.pop %v682
        %v699 = vrsqrt.pop %v683
        %v700 = vrsqrt.pop %v684
        %v701 = vrsqrt.pop %v685
        %v702 = vrsqrt.pop %v686
        %v703 = vrsqrt.pop %v687
        %v704 = vrsqrt.pop %v688
        %v705 = vrsqrt.pop %v689
        %v706 = vmul.f32 %v547, %v690
        %v707 = vmul.f32 %v550, %v691
        %v708 = vmul.f32 %v555, %v692
        %v709 = vmul.f32 %v558, %v693
        %v710 = vmul.f32 %v563, %v694
        %v711 = vmul.f32 %v566, %v695
        %v712 = vmul.f32 %v571, %v696
        %v713 = vmul.f32 %v574, %v697
        %v714 = vmul.f32 %v579, %v698
        %v715 = vmul.f32 %v582, %v699
        %v716 = vmul.f32 %v587, %v700
        %v717 = vmul.f32 %v590, %v701
        %v718 = vmul.f32 %v595, %v702
        %v719 = vmul.f32 %v598, %v703
        %v720 = vmul.f32 %v603, %v704
        %v721 = vmul.f32 %v606, %v705
        %722 = vst.msk [vmem:[%s226] sm:$0xff] %vm625, %v706
        %723 = vst.msk [vmem:[%s226 + $0x8] sm:$0xff] %vm625, %v707
        %724 = vst.msk [vmem:[%s226 + $0x10] sm:$0xff] %vm625, %v708
        %725 = vst.msk [vmem:[%s226 + $0x18] sm:$0xff] %vm625, %v709
        %726 = vst.msk [vmem:[%s226 + $0x20] sm:$0xff] %vm625, %v710
        %727 = vst.msk [vmem:[%s226 + $0x28] sm:$0xff] %vm625, %v711
        %728 = vst.msk [vmem:[%s226 + $0x30] sm:$0xff] %vm625, %v712
        %729 = vst.msk [vmem:[%s226 + $0x38] sm:$0xff] %vm625, %v713
        %730 = vst.msk [vmem:[%s226 + $0x40] sm:$0xff] %vm625, %v714
        %731 = vst.msk [vmem:[%s226 + $0x48] sm:$0xff] %vm625, %v715
        %732 = vst.msk [vmem:[%s226 + $0x50] sm:$0xff] %vm625, %v716
        %733 = vst.msk [vmem:[%s226 + $0x58] sm:$0xff] %vm625, %v717
        %734 = vst.msk [vmem:[%s226 + $0x60] sm:$0xff] %vm625, %v718
        %735 = vst.msk [vmem:[%s226 + $0x68] sm:$0xff] %vm625, %v719
        %736 = vst.msk [vmem:[%s226 + $0x70] sm:$0xff] %vm625, %v720
        %737 = vst.msk [vmem:[%s226 + $0x78] sm:$0xff] %vm625, %v721
        %s738 = sand.u32 %s134, 1
        %s739 = sand.u32 %s134, 1
        %s740 = smul.addr %s739, 128
        %s741 = scalar_lea.vmem [#allocation2], %s740
        // Predicated region
        $region41: #{tpu_custom_call.1} parent=39 // pred_check
          %p742 = pneg %p144
        $region42: #{tpu_custom_call.1} parent=39 // pred_check_branch
          %744 = sbr.rel (%p742) target = $region44
        $region43: #{tpu_custom_call.1} parent=39 // pred_region
          %s745 = smul.u32 16, %s16
          %s746 = ssub.s32 125, %s745
          %p747 = scmp.lt.s32.totalorder %s746, 16
          %s748 = scalar_select %p747, %s746, 16
          %s749 = smul.u32 128, %s748
          %p750 = scmp.ne.s32.totalorder 0, %s749
          %s751 = smul.addr %s745, 8
          %s752 = scalar_lea.vmem %s5, %s751
          // Predicated region
          $region45: #{tpu_custom_call.1} parent=43 // pred_check
            %p753 = pneg %p750
          $region46: #{tpu_custom_call.1} parent=43 // pred_check_branch
            %755 = sbr.rel (%p753) target = $region48
          $region47: #{tpu_custom_call.1} parent=43 // pred_region
            // Predicated region
            $region49: #{tpu_custom_call.1} parent=47 // pred_check
              _
            $region50: #{tpu_custom_call.1} parent=47 // pred_check_branch
              %757 = sbr.rel (0) target = $region52
            $region51: #{tpu_custom_call.1} parent=47 // pred_region
              // Predicated region
              $region71: #{tpu_custom_call.1} parent=51 // pred_check
                _
              $region72: #{tpu_custom_call.1} parent=51 // pred_check_branch
                %837 = sbr.rel (0) target = $region74
              $region73: #{tpu_custom_call.1} parent=51 // pred_region
                %s838 = sshrl.u32 %s748, 4
                // While loop
                $region75: #{tpu_custom_call.1} parent=73 // loop_pre_header
                  _
                $region76: #{tpu_custom_call.1} parent=73 // loop_header
                  %s840 = sphi 0, %s842
                  %p841 = scmp.ge.s32.totalorder %s840, %s838
                  %s845 = sphi 0, %s882
                  %s846 = sphi %s741, %s885
                  %s847 = sphi %s752, %s886
                $region77: #{tpu_custom_call.1} parent=73 // loop_header_branch
                  %844 = sbr.rel (%p841) target = $region81
                $region78: #{tpu_custom_call.1} parent=73 // loop_body
                  %v848 = vld [vmem:[%s846] sm:$0xff]
                  %849 = vst [vmem:[%s847] sm:$0xff] %v848
                  %v850 = vld [vmem:[%s846 + $0x8] sm:$0xff]
                  %851 = vst [vmem:[%s847 + $0x8] sm:$0xff] %v850
                  %v852 = vld [vmem:[%s846 + $0x10] sm:$0xff]
                  %853 = vst [vmem:[%s847 + $0x10] sm:$0xff] %v852
                  %v854 = vld [vmem:[%s846 + $0x18] sm:$0xff]
                  %855 = vst [vmem:[%s847 + $0x18] sm:$0xff] %v854
                  %v856 = vld [vmem:[%s846 + $0x20] sm:$0xff]
                  %857 = vst [vmem:[%s847 + $0x20] sm:$0xff] %v856
                  %v858 = vld [vmem:[%s846 + $0x28] sm:$0xff]
                  %859 = vst [vmem:[%s847 + $0x28] sm:$0xff] %v858
                  %v860 = vld [vmem:[%s846 + $0x30] sm:$0xff]
                  %861 = vst [vmem:[%s847 + $0x30] sm:$0xff] %v860
                  %v862 = vld [vmem:[%s846 + $0x38] sm:$0xff]
                  %863 = vst [vmem:[%s847 + $0x38] sm:$0xff] %v862
                  %v864 = vld [vmem:[%s846 + $0x40] sm:$0xff]
                  %865 = vst [vmem:[%s847 + $0x40] sm:$0xff] %v864
                  %v866 = vld [vmem:[%s846 + $0x48] sm:$0xff]
                  %867 = vst [vmem:[%s847 + $0x48] sm:$0xff] %v866
                  %v868 = vld [vmem:[%s846 + $0x50] sm:$0xff]
                  %869 = vst [vmem:[%s847 + $0x50] sm:$0xff] %v868
                  %v870 = vld [vmem:[%s846 + $0x58] sm:$0xff]
                  %871 = vst [vmem:[%s847 + $0x58] sm:$0xff] %v870
                  %v872 = vld [vmem:[%s846 + $0x60] sm:$0xff]
                  %873 = vst [vmem:[%s847 + $0x60] sm:$0xff] %v872
                  %v874 = vld [vmem:[%s846 + $0x68] sm:$0xff]
                  %875 = vst [vmem:[%s847 + $0x68] sm:$0xff] %v874
                  %v876 = vld [vmem:[%s846 + $0x70] sm:$0xff]
                  %877 = vst [vmem:[%s847 + $0x70] sm:$0xff] %v876
                  %v878 = vld [vmem:[%s846 + $0x78] sm:$0xff]
                  %879 = vst [vmem:[%s847 + $0x78] sm:$0xff] %v878
                  %s880 = sadd.s32 1, %s845
                  %p881 = scmp.ge.s32.totalorder %s880, %s838
                  %s882 = scalar_select %p881, 0, %s880
                  %s883 = smul.u32 %s882, 128
                  %s884 = smul.u32 %s882, 128
                  %s885 = scalar_lea.vmem %s741, %s883 [#allocation2]
                  %s886 = scalar_lea.vmem %s752, %s884
                $region79: #{tpu_custom_call.1} parent=73 // loop_footer
                  %s842 = sadd.s32 %s840, 1
                $region80: #{tpu_custom_call.1} parent=73 // loop_footer_branch
                  %839 = sbr.rel target = $region76
                $region81: #{tpu_custom_call.1} parent=73 // loop_exit
                  _
                %s887 = sshrl.u32 %s748, 4
                %s888 = sand.u32 %s748, 15
                %s889 = smul.u32 %s887, 16
                %s890 = smul.u32 8, %s889
                %s891 = scalar_lea.vmem %s741, %s890 [#allocation2]
                %s892 = smul.u32 8, %s889
                %s893 = scalar_lea.vmem %s752, %s892
                // While loop
                $region82: #{tpu_custom_call.1} parent=73 // loop_pre_header
                  _
                $region83: #{tpu_custom_call.1} parent=73 // loop_header
                  %s895 = sphi 0, %s897
                  %p896 = scmp.ge.s32.totalorder %s895, %s888
                  %s900 = sphi 0, %s907
                  %s901 = sphi %s891, %s910
                  %s902 = sphi %s893, %s911
                $region84: #{tpu_custom_call.1} parent=73 // loop_header_branch
                  %899 = sbr.rel (%p896) target = $region88
                $region85: #{tpu_custom_call.1} parent=73 // loop_body
                  %v903 = vld [vmem:[%s901] sm:$0xff]
                  %904 = vst [vmem:[%s902] sm:$0xff] %v903
                  %s905 = sadd.s32 1, %s900
                  %p906 = scmp.ge.s32.totalorder %s905, %s888
                  %s907 = scalar_select %p906, 0, %s905
                  %s908 = smul.u32 %s907, 8
                  %s909 = smul.u32 %s907, 8
                  %s910 = scalar_lea.vmem %s891, %s908 [#allocation2]
                  %s911 = scalar_lea.vmem %s893, %s909
                $region86: #{tpu_custom_call.1} parent=73 // loop_footer
                  %s897 = sadd.s32 %s895, 1
                $region87: #{tpu_custom_call.1} parent=73 // loop_footer_branch
                  %894 = sbr.rel target = $region83
                $region88: #{tpu_custom_call.1} parent=73 // loop_exit
                  _
              $region74: #{tpu_custom_call.1} parent=51 // pred_fallthru
                _
              // Predicated region
              $region89: #{tpu_custom_call.1} parent=51 // pred_check
                _
              $region90: #{tpu_custom_call.1} parent=51 // pred_check_branch
                %913 = sbr.rel target = $region92
              $region91: #{tpu_custom_call.1} parent=51 // pred_region
                _
              $region92: #{tpu_custom_call.1} parent=51 // pred_fallthru
                _
            $region52: #{tpu_custom_call.1} parent=47 // pred_fallthru
              _
            // Predicated region
            $region53: #{tpu_custom_call.1} parent=47 // pred_check
              _
            $region54: #{tpu_custom_call.1} parent=47 // pred_check_branch
              %759 = sbr.rel target = $region56
            $region55: #{tpu_custom_call.1} parent=47 // pred_region
              %s761 = ssub.s32 256, 1
              %s762 = sshrl.u32 %s748, 4
              // While loop
              $region57: #{tpu_custom_call.1} parent=55 // loop_pre_header
                _
              $region58: #{tpu_custom_call.1} parent=55 // loop_header
                %s764 = sphi 0, %s766
                %p765 = scmp.ge.s32.totalorder %s764, %s762
                %s769 = sphi 0, %s806
                %s770 = sphi %s741, %s809
                %s771 = sphi %s752, %s810
              $region59: #{tpu_custom_call.1} parent=55 // loop_header_branch
                %768 = sbr.rel (%p765) target = $region63
              $region60: #{tpu_custom_call.1} parent=55 // loop_body
                %v772 = vld [vmem:[%s770] sm:%s761]
                %773 = vst [vmem:[%s771] sm:%s761] %v772
                %v774 = vld [vmem:[%s770 + $0x8] sm:%s761]
                %775 = vst [vmem:[%s771 + $0x8] sm:%s761] %v774
                %v776 = vld [vmem:[%s770 + $0x10] sm:%s761]
                %777 = vst [vmem:[%s771 + $0x10] sm:%s761] %v776
                %v778 = vld [vmem:[%s770 + $0x18] sm:%s761]
                %779 = vst [vmem:[%s771 + $0x18] sm:%s761] %v778
                %v780 = vld [vmem:[%s770 + $0x20] sm:%s761]
                %781 = vst [vmem:[%s771 + $0x20] sm:%s761] %v780
                %v782 = vld [vmem:[%s770 + $0x28] sm:%s761]
                %783 = vst [vmem:[%s771 + $0x28] sm:%s761] %v782
                %v784 = vld [vmem:[%s770 + $0x30] sm:%s761]
                %785 = vst [vmem:[%s771 + $0x30] sm:%s761] %v784
                %v786 = vld [vmem:[%s770 + $0x38] sm:%s761]
                %787 = vst [vmem:[%s771 + $0x38] sm:%s761] %v786
                %v788 = vld [vmem:[%s770 + $0x40] sm:%s761]
                %789 = vst [vmem:[%s771 + $0x40] sm:%s761] %v788
                %v790 = vld [vmem:[%s770 + $0x48] sm:%s761]
                %791 = vst [vmem:[%s771 + $0x48] sm:%s761] %v790
                %v792 = vld [vmem:[%s770 + $0x50] sm:%s761]
                %793 = vst [vmem:[%s771 + $0x50] sm:%s761] %v792
                %v794 = vld [vmem:[%s770 + $0x58] sm:%s761]
                %795 = vst [vmem:[%s771 + $0x58] sm:%s761] %v794
                %v796 = vld [vmem:[%s770 + $0x60] sm:%s761]
                %797 = vst [vmem:[%s771 + $0x60] sm:%s761] %v796
                %v798 = vld [vmem:[%s770 + $0x68] sm:%s761]
                %799 = vst [vmem:[%s771 + $0x68] sm:%s761] %v798
                %v800 = vld [vmem:[%s770 + $0x70] sm:%s761]
                %801 = vst [vmem:[%s771 + $0x70] sm:%s761] %v800
                %v802 = vld [vmem:[%s770 + $0x78] sm:%s761]
                %803 = vst [vmem:[%s771 + $0x78] sm:%s761] %v802
                %s804 = sadd.s32 1, %s769
                %p805 = scmp.ge.s32.totalorder %s804, %s762
                %s806 = scalar_select %p805, 0, %s804
                %s807 = smul.u32 %s806, 128
                %s808 = smul.u32 %s806, 128
                %s809 = scalar_lea.vmem %s741, %s807 [#allocation2]
                %s810 = scalar_lea.vmem %s752, %s808
              $region61: #{tpu_custom_call.1} parent=55 // loop_footer
                %s766 = sadd.s32 %s764, 1
              $region62: #{tpu_custom_call.1} parent=55 // loop_footer_branch
                %763 = sbr.rel target = $region58
              $region63: #{tpu_custom_call.1} parent=55 // loop_exit
                _
              %s811 = sshrl.u32 %s748, 4
              %s812 = sand.u32 %s748, 15
              %s813 = smul.u32 %s811, 16
              %s814 = smul.u32 8, %s813
              %s815 = scalar_lea.vmem %s741, %s814 [#allocation2]
              %s816 = smul.u32 8, %s813
              %s817 = scalar_lea.vmem %s752, %s816
              // While loop
              $region64: #{tpu_custom_call.1} parent=55 // loop_pre_header
                _
              $region65: #{tpu_custom_call.1} parent=55 // loop_header
                %s819 = sphi 0, %s821
                %p820 = scmp.ge.s32.totalorder %s819, %s812
                %s824 = sphi 0, %s831
                %s825 = sphi %s815, %s834
                %s826 = sphi %s817, %s835
              $region66: #{tpu_custom_call.1} parent=55 // loop_header_branch
                %823 = sbr.rel (%p820) target = $region70
              $region67: #{tpu_custom_call.1} parent=55 // loop_body
                %v827 = vld [vmem:[%s825] sm:%s761]
                %828 = vst [vmem:[%s826] sm:%s761] %v827
                %s829 = sadd.s32 1, %s824
                %p830 = scmp.ge.s32.totalorder %s829, %s812
                %s831 = scalar_select %p830, 0, %s829
                %s832 = smul.u32 %s831, 8
                %s833 = smul.u32 %s831, 8
                %s834 = scalar_lea.vmem %s815, %s832 [#allocation2]
                %s835 = scalar_lea.vmem %s817, %s833
              $region68: #{tpu_custom_call.1} parent=55 // loop_footer
                %s821 = sadd.s32 %s819, 1
              $region69: #{tpu_custom_call.1} parent=55 // loop_footer_branch
                %818 = sbr.rel target = $region65
              $region70: #{tpu_custom_call.1} parent=55 // loop_exit
                _
            $region56: #{tpu_custom_call.1} parent=47 // pred_fallthru
              _
          $region48: #{tpu_custom_call.1} parent=43 // pred_fallthru
            _
          %914 = vnop
        $region44: #{tpu_custom_call.1} parent=39 // pred_fallthru
          _
      $region40: #{tpu_custom_call.1} parent=5 // pred_fallthru
        _
      %p915 = scmp.le.s32.totalorder 2, %s11
      // Predicated region
      $region93: #{tpu_custom_call.1} parent=5 // pred_check
        %p916 = pneg %p915
      $region94: #{tpu_custom_call.1} parent=5 // pred_check_branch
        %918 = sbr.rel (%p916) target = $region96
      $region95: #{tpu_custom_call.1} parent=5 // pred_region
        %s919 = ssub.s32 %s11, 2
        // Predicated region
        $region97: #{tpu_custom_call.1} parent=95 // pred_check
          %p920 = pneg %p150
        $region98: #{tpu_custom_call.1} parent=95 // pred_check_branch
          %922 = sbr.rel (%p920) target = $region100
        $region99: #{tpu_custom_call.1} parent=95 // pred_region
          %s923 = sand.u32 %s135, 1
          %s924 = sand.u32 %s135, 1
          %s925 = smul.addr %s924, 128
          %s926 = scalar_lea.vmem [#allocation2], %s925
        $region100: #{tpu_custom_call.1} parent=95 // pred_fallthru
          _
      $region96: #{tpu_custom_call.1} parent=5 // pred_fallthru
        _
    $region6: #{tpu_custom_call.1} parent=1 // loop_footer
      %s15 = sadd.s32 1, %s11
    $region7: #{tpu_custom_call.1} parent=1 // loop_footer_branch
      %10 = sbr.rel target = $region3
    $region8: #{tpu_custom_call.1} parent=1 // loop_exit
      _

</llo_original>
